<compile_context>
chip_gen: v6e
topology: v6e:2x2x1
jax: 0.10.0
libtpu: 0.0.40
codegen_flags: <defaults>
</compile_context>

<pallas_src>
import jax
import jax.numpy as jnp
from jax.experimental import pallas as pl
from jax.experimental.pallas import tpu as pltpu


def _softplus(r):
    # torch.log1p(torch.exp(r)); written as log(1+exp) for safe Mosaic lowering.
    return jnp.log(1.0 + jnp.exp(r))


def _kl_normal(mu, sigma):
    # HierarchicalNormalPrior with prior mu=0, logvar=0  =>  var=1.
    return -jnp.log(sigma) + 0.5 * (sigma * sigma + mu * mu) - 0.5


# --------------------------------------------------------------------------- #
# Kernel A: sample the effective weight/bias once + compute the KL scalar.
# --------------------------------------------------------------------------- #
def sample_and_kl_kernel(wpack_ref, bpack_ref, w_ref, b_ref, kl_ref):
    """wpack_ref: (6, IN, OUT) rows = [gW_mu^T, gW_rho^T, eps_gW^T,
                                       iW_mu^T, iW_rho^T, eps_iW^T]
       bpack_ref: (8, OUT)     rows = [gb_mu, gb_rho, eps_gb,
                                       ib_mu, ib_rho, eps_ib, 0, 0]
       w_ref: (IN, OUT) sampled W^T,  b_ref: (1, OUT) sampled bias,
       kl_ref: (1, 1) total KL."""
    gw_mu, gw_rho, gw_eps = wpack_ref[0], wpack_ref[1], wpack_ref[2]
    iw_mu, iw_rho, iw_eps = wpack_ref[3], wpack_ref[4], wpack_ref[5]
    gw_sig = _softplus(gw_rho)
    iw_sig = _softplus(iw_rho)
    w_ref[...] = (gw_mu + gw_sig * gw_eps) + (iw_mu + iw_sig * iw_eps)

    bp = bpack_ref[...]                       # (8, OUT), keep everything 2-D
    gb_mu, gb_rho, gb_eps = bp[0:1], bp[1:2], bp[2:3]
    ib_mu, ib_rho, ib_eps = bp[3:4], bp[4:5], bp[5:6]
    gb_sig = _softplus(gb_rho)
    ib_sig = _softplus(ib_rho)
    b_ref[...] = (gb_mu + gb_sig * gb_eps) + (ib_mu + ib_sig * ib_eps)

    kl = (jnp.sum(_kl_normal(gw_mu, gw_sig), keepdims=True)
          + jnp.sum(_kl_normal(iw_mu, iw_sig), keepdims=True)
          + jnp.sum(_kl_normal(gb_mu, gb_sig), keepdims=True)
          + jnp.sum(_kl_normal(ib_mu, ib_sig), keepdims=True))
    kl_ref[...] = kl


# --------------------------------------------------------------------------- #
# Kernel B: batch-tiled linear  out = x @ W^T + b   (MXU).
# --------------------------------------------------------------------------- #
def linear_kernel(x_ref, w_ref, b_ref, o_ref):
    o_ref[...] = (jnp.dot(x_ref[...], w_ref[...],
                          preferred_element_type=jnp.float32)
                  + b_ref[...]).astype(o_ref.dtype)


# --------------------------------------------------------------------------- #
# Wrapper
# --------------------------------------------------------------------------- #
def hierarchical_bayesian_linear(x, params, noise, *, tile_n=256):
    """x: [N, IN] f32.  Returns (out [N, OUT], kl scalar) like the module."""
    N, IN = x.shape
    OUT = params["group_weight_mu"].shape[0]

    # Batch tile: as large as reasonable (multiple of 8, divides N).
    tile_n = min(tile_n, N)
    tile_n = max(8, (tile_n // 8) * 8)
    assert N % tile_n == 0, "pad the batch to a multiple of tile_n (multiple of 8)"

    # Pack weight-shaped params+noise (transposed so the kernel computes x @ W^T
    # directly) and bias-shaped params+noise into two slabs -> 2 DMAs, 2 refs.
    wpack = jnp.stack(
        [params["group_weight_mu"].T, params["group_weight_rho"].T, noise["eps_gw"].T,
         params["individual_weight_mu"].T, params["individual_weight_rho"].T,
         noise["eps_iw"].T], axis=0).astype(jnp.float32)          # (6, IN, OUT)
    brows = jnp.stack(
        [params["group_bias_mu"], params["group_bias_rho"], noise["eps_gb"],
         params["individual_bias_mu"], params["individual_bias_rho"],
         noise["eps_ib"]], axis=0).astype(jnp.float32)            # (6, OUT)
    bpack = jnp.concatenate([brows, jnp.zeros((2, OUT), jnp.float32)], axis=0)

    # ---- Kernel A: one-shot weight/bias sampling + KL ---------------------- #
    w_t, bias, kl = pl.pallas_call(
        sample_and_kl_kernel,
        out_shape=(jax.ShapeDtypeStruct((IN, OUT), jnp.float32),
                   jax.ShapeDtypeStruct((1, OUT), jnp.float32),
                   jax.ShapeDtypeStruct((1, 1), jnp.float32)),
        grid_spec=pltpu.PrefetchScalarGridSpec(
            num_scalar_prefetch=0,
            grid=(1,),
            in_specs=[pl.BlockSpec((6, IN, OUT), lambda i: (0, 0, 0)),
                      pl.BlockSpec((8, OUT), lambda i: (0, 0))],
            out_specs=(pl.BlockSpec((IN, OUT), lambda i: (0, 0)),
                       pl.BlockSpec((1, OUT), lambda i: (0, 0)),
                       pl.BlockSpec((1, 1), lambda i: (0, 0))),
        ),
        compiler_params=pltpu.CompilerParams(
            dimension_semantics=("arbitrary",)),
    )(wpack, bpack)

    # ---- Kernel B: batch-tiled linear on the MXU --------------------------- #
    out = pl.pallas_call(
        linear_kernel,
        out_shape=jax.ShapeDtypeStruct((N, OUT), x.dtype),
        grid_spec=pltpu.PrefetchScalarGridSpec(
            num_scalar_prefetch=0,
            grid=(N // tile_n,),
            in_specs=[pl.BlockSpec((tile_n, IN), lambda i: (i, 0)),
                      pl.BlockSpec((IN, OUT), lambda i: (0, 0)),   # grid-invariant
                      pl.BlockSpec((1, OUT), lambda i: (0, 0))],   # grid-invariant
            out_specs=pl.BlockSpec((tile_n, OUT), lambda i: (i, 0)),
        ),
        compiler_params=pltpu.CompilerParams(
            dimension_semantics=("parallel",),
            vmem_limit_bytes=32 * 1024 * 1024),
        cost_estimate=pl.CostEstimate(
            flops=2 * N * IN * OUT + N * OUT,
            transcendentals=0,
            bytes_accessed=4 * (N * IN + N * OUT + IN * OUT + OUT)),
    )(x, w_t, bias)

    return out, kl[0, 0]


# --------------------------------------------------------------------------- #
# Parameter / noise construction (matches reset_parameters) + pure-JAX reference
# --------------------------------------------------------------------------- #
def init_params(key, in_features, out_features):
    ks = jax.random.split(key, 4)
    bound = 1.0 / (in_features ** 0.5)   # kaiming_uniform_ with a=sqrt(5)
    f32 = jnp.float32
    return {
        "group_weight_mu": jax.random.uniform(ks[0], (out_features, in_features), f32, -bound, bound),
        "group_weight_rho": jnp.full((out_features, in_features), -5.0, f32),
        "group_bias_mu": jax.random.uniform(ks[1], (out_features,), f32, -0.1, 0.1),
        "group_bias_rho": jnp.full((out_features,), -5.0, f32),
        "individual_weight_mu": jax.random.uniform(ks[2], (out_features, in_features), f32, -bound, bound),
        "individual_weight_rho": jnp.full((out_features, in_features), -5.0, f32),
        "individual_bias_mu": jax.random.uniform(ks[3], (out_features,), f32, -0.1, 0.1),
        "individual_bias_rho": jnp.full((out_features,), -5.0, f32),
    }


def make_noise(key, in_features, out_features):
    ks = jax.random.split(key, 4)
    f32 = jnp.float32
    return {
        "eps_gw": jax.random.normal(ks[0], (out_features, in_features), f32),
        "eps_gb": jax.random.normal(ks[1], (out_features,), f32),
        "eps_iw": jax.random.normal(ks[2], (out_features, in_features), f32),
        "eps_ib": jax.random.normal(ks[3], (out_features,), f32),
    }


def reference(x, p, n):
    gw_sig = _softplus(p["group_weight_rho"])
    iw_sig = _softplus(p["individual_weight_rho"])
    gb_sig = _softplus(p["group_bias_rho"])
    ib_sig = _softplus(p["individual_bias_rho"])
    w = (p["group_weight_mu"] + gw_sig * n["eps_gw"]
         + p["individual_weight_mu"] + iw_sig * n["eps_iw"])
    b = (p["group_bias_mu"] + gb_sig * n["eps_gb"]
         + p["individual_bias_mu"] + ib_sig * n["eps_ib"])
    out = jnp.dot(x, w.T, precision=jax.lax.Precision.HIGHEST) + b
    kl = (_kl_normal(p["group_weight_mu"], gw_sig).sum()
          + _kl_normal(p["individual_weight_mu"], iw_sig).sum()
          + _kl_normal(p["group_bias_mu"], gb_sig).sum()
          + _kl_normal(p["individual_bias_mu"], ib_sig).sum())
    return out, kl


if __name__ == "__main__":
    IN, OUT, N = 128, 128, 512          # small: hidden=128, batch=512 (2 grid steps)
    key = jax.random.PRNGKey(0)
    k_x, k_p, k_n = jax.random.split(key, 3)

    x = jax.random.normal(k_x, (N, IN), jnp.float32)
    params = init_params(k_p, IN, OUT)
    noise = make_noise(k_n, IN, OUT)

    out, kl = hierarchical_bayesian_linear(x, params, noise, tile_n=256)
    out = jax.block_until_ready(out)
    kl = jax.block_until_ready(kl)

    ref_out, ref_kl = reference(x, params, noise)
    assert out.shape == (N, OUT)
    assert jnp.allclose(out, ref_out, atol=1e-2, rtol=1e-2), "output mismatch vs reference"
    assert jnp.allclose(kl, ref_kl, rtol=1e-3), "KL mismatch vs reference"

    print("KERNEL_OK")
</pallas_src>

<mosaic_0001>
module attributes {stable_mosaic.version = 11 : i64} {
  func.func @sample_and_kl_kernel(%arg0: i32, %arg1: memref<6x128x128xf32, #tpu.memory_space<vmem>>, %arg2: memref<8x128xf32, #tpu.memory_space<vmem>>, %arg3: memref<128x128xf32, #tpu.memory_space<vmem>>, %arg4: memref<1x128xf32, #tpu.memory_space<vmem>>, %arg5: memref<1x1xf32, #tpu.memory_space<vmem>>) attributes {dimension_semantics = [#tpu.dimension_semantics<arbitrary>], iteration_bounds = array<i64: 1>, scalar_prefetch = 0 : i64, scratch_operands = 0 : i64, tpu.core_type = #tpu.core_type<tc>, window_params = [{pipeline_mode = #tpu.pipeline_mode<synchronous>, transform_indices = @transform_0, window_bounds = array<i64: 6, 128, 128>}, {pipeline_mode = #tpu.pipeline_mode<synchronous>, transform_indices = @transform_1, window_bounds = array<i64: 8, 128>}, {pipeline_mode = #tpu.pipeline_mode<synchronous>, transform_indices = @transform_2, window_bounds = array<i64: 128, 128>}, {pipeline_mode = #tpu.pipeline_mode<synchronous>, transform_indices = @transform_3, window_bounds = array<i64: 1, 128>}, {pipeline_mode = #tpu.pipeline_mode<synchronous>, transform_indices = @transform_4, window_bounds = array<i64: 1, 1>}]} {
    %c0 = arith.constant 0 : index
    %c0_0 = arith.constant 0 : index
    %c0_1 = arith.constant 0 : index
    %0 = vector.load %arg1[%c0, %c0_0, %c0_1] : memref<6x128x128xf32, #tpu.memory_space<vmem>>, vector<1x128x128xf32>
    %1 = vector.shape_cast %0 : vector<1x128x128xf32> to vector<128x128xf32>
    %c1 = arith.constant 1 : index
    %c0_2 = arith.constant 0 : index
    %c0_3 = arith.constant 0 : index
    %2 = vector.load %arg1[%c1, %c0_2, %c0_3] : memref<6x128x128xf32, #tpu.memory_space<vmem>>, vector<1x128x128xf32>
    %3 = vector.shape_cast %2 : vector<1x128x128xf32> to vector<128x128xf32>
    %c2 = arith.constant 2 : index
    %c0_4 = arith.constant 0 : index
    %c0_5 = arith.constant 0 : index
    %4 = vector.load %arg1[%c2, %c0_4, %c0_5] : memref<6x128x128xf32, #tpu.memory_space<vmem>>, vector<1x128x128xf32>
    %5 = vector.shape_cast %4 : vector<1x128x128xf32> to vector<128x128xf32>
    %c3 = arith.constant 3 : index
    %c0_6 = arith.constant 0 : index
    %c0_7 = arith.constant 0 : index
    %6 = vector.load %arg1[%c3, %c0_6, %c0_7] : memref<6x128x128xf32, #tpu.memory_space<vmem>>, vector<1x128x128xf32>
    %7 = vector.shape_cast %6 : vector<1x128x128xf32> to vector<128x128xf32>
    %c4 = arith.constant 4 : index
    %c0_8 = arith.constant 0 : index
    %c0_9 = arith.constant 0 : index
    %8 = vector.load %arg1[%c4, %c0_8, %c0_9] : memref<6x128x128xf32, #tpu.memory_space<vmem>>, vector<1x128x128xf32>
    %9 = vector.shape_cast %8 : vector<1x128x128xf32> to vector<128x128xf32>
    %c5 = arith.constant 5 : index
    %c0_10 = arith.constant 0 : index
    %c0_11 = arith.constant 0 : index
    %10 = vector.load %arg1[%c5, %c0_10, %c0_11] : memref<6x128x128xf32, #tpu.memory_space<vmem>>, vector<1x128x128xf32>
    %11 = vector.shape_cast %10 : vector<1x128x128xf32> to vector<128x128xf32>
    %12 = math.exp %3 : vector<128x128xf32>
    %cst = arith.constant 1.000000e+00 : f32
    %13 = vector.broadcast %cst : f32 to vector<128x128xf32>
    %14 = arith.addf %13, %12 : vector<128x128xf32>
    %15 = math.log %14 : vector<128x128xf32>
    %16 = math.exp %9 : vector<128x128xf32>
    %cst_12 = arith.constant 1.000000e+00 : f32
    %17 = vector.broadcast %cst_12 : f32 to vector<128x128xf32>
    %18 = arith.addf %17, %16 : vector<128x128xf32>
    %19 = math.log %18 : vector<128x128xf32>
    %20 = arith.mulf %15, %5 : vector<128x128xf32>
    %21 = arith.addf %1, %20 : vector<128x128xf32>
    %22 = arith.mulf %19, %11 : vector<128x128xf32>
    %23 = arith.addf %7, %22 : vector<128x128xf32>
    %24 = arith.addf %21, %23 : vector<128x128xf32>
    %c0_13 = arith.constant 0 : index
    %c0_14 = arith.constant 0 : index
    %25 = vector.load %arg3[%c0_13, %c0_14] : memref<128x128xf32, #tpu.memory_space<vmem>>, vector<128x128xf32>
    tpu.vector_store %arg3[%c0_13, %c0_14], %24 {strides = array<i32>} : memref<128x128xf32, #tpu.memory_space<vmem>>, vector<128x128xf32>,
    %c0_15 = arith.constant 0 : index
    %c0_16 = arith.constant 0 : index
    %26 = vector.load %arg2[%c0_15, %c0_16] : memref<8x128xf32, #tpu.memory_space<vmem>>, vector<8x128xf32>
    %27 = vector.extract_strided_slice %26 {offsets = [0, 0], sizes = [1, 128], strides = [1, 1]} : vector<8x128xf32> to vector<1x128xf32>
    %28 = vector.extract_strided_slice %26 {offsets = [1, 0], sizes = [1, 128], strides = [1, 1]} : vector<8x128xf32> to vector<1x128xf32>
    %29 = vector.extract_strided_slice %26 {offsets = [2, 0], sizes = [1, 128], strides = [1, 1]} : vector<8x128xf32> to vector<1x128xf32>
    %30 = vector.extract_strided_slice %26 {offsets = [3, 0], sizes = [1, 128], strides = [1, 1]} : vector<8x128xf32> to vector<1x128xf32>
    %31 = vector.extract_strided_slice %26 {offsets = [4, 0], sizes = [1, 128], strides = [1, 1]} : vector<8x128xf32> to vector<1x128xf32>
    %32 = vector.extract_strided_slice %26 {offsets = [5, 0], sizes = [1, 128], strides = [1, 1]} : vector<8x128xf32> to vector<1x128xf32>
    %33 = math.exp %28 : vector<1x128xf32>
    %cst_17 = arith.constant 1.000000e+00 : f32
    %34 = vector.broadcast %cst_17 : f32 to vector<1x128xf32>
    %35 = arith.addf %34, %33 : vector<1x128xf32>
    %36 = math.log %35 : vector<1x128xf32>
    %37 = math.exp %31 : vector<1x128xf32>
    %cst_18 = arith.constant 1.000000e+00 : f32
    %38 = vector.broadcast %cst_18 : f32 to vector<1x128xf32>
    %39 = arith.addf %38, %37 : vector<1x128xf32>
    %40 = math.log %39 : vector<1x128xf32>
    %41 = arith.mulf %36, %29 : vector<1x128xf32>
    %42 = arith.addf %27, %41 : vector<1x128xf32>
    %43 = arith.mulf %40, %32 : vector<1x128xf32>
    %44 = arith.addf %30, %43 : vector<1x128xf32>
    %45 = arith.addf %42, %44 : vector<1x128xf32>
    %c0_19 = arith.constant 0 : index
    %c0_20 = arith.constant 0 : index
    %46 = vector.load %arg4[%c0_19, %c0_20] : memref<1x128xf32, #tpu.memory_space<vmem>>, vector<1x128xf32>
    tpu.vector_store %arg4[%c0_19, %c0_20], %45 {strides = array<i32>} : memref<1x128xf32, #tpu.memory_space<vmem>>, vector<1x128xf32>,
    %47 = math.log %15 : vector<128x128xf32>
    %cst_21 = arith.constant 0.000000e+00 : f32
    %48 = vector.broadcast %cst_21 : f32 to vector<128x128xf32>
    %49 = arith.subf %48, %47 : vector<128x128xf32>
    %50 = arith.mulf %15, %15 : vector<128x128xf32>
    %51 = arith.mulf %1, %1 : vector<128x128xf32>
    %52 = arith.addf %50, %51 : vector<128x128xf32>
    %cst_22 = arith.constant 5.000000e-01 : f32
    %53 = vector.broadcast %cst_22 : f32 to vector<128x128xf32>
    %54 = arith.mulf %53, %52 : vector<128x128xf32>
    %55 = arith.addf %49, %54 : vector<128x128xf32>
    %cst_23 = arith.constant 5.000000e-01 : f32
    %56 = vector.broadcast %cst_23 : f32 to vector<128x128xf32>
    %57 = arith.subf %55, %56 : vector<128x128xf32>
    %58 = vector.shape_cast %57 : vector<128x128xf32> to vector<1x128x128xf32>
    %cst_24 = arith.constant dense<0.000000e+00> : vector<1xf32>
    %59 = vector.multi_reduction <add>, %58, %cst_24 [1, 2] : vector<1x128x128xf32> to vector<1xf32>
    %60 = vector.shape_cast %59 : vector<1xf32> to vector<1x1x1xf32>
    %61 = vector.extract %60[0, 0, 0] : f32 from vector<1x1x1xf32>
    %62 = vector.broadcast %61 : f32 to vector<1x1xf32>
    %63 = math.log %19 : vector<128x128xf32>
    %cst_25 = arith.constant 0.000000e+00 : f32
    %64 = vector.broadcast %cst_25 : f32 to vector<128x128xf32>
    %65 = arith.subf %64, %63 : vector<128x128xf32>
    %66 = arith.mulf %19, %19 : vector<128x128xf32>
    %67 = arith.mulf %7, %7 : vector<128x128xf32>
    %68 = arith.addf %66, %67 : vector<128x128xf32>
    %cst_26 = arith.constant 5.000000e-01 : f32
    %69 = vector.broadcast %cst_26 : f32 to vector<128x128xf32>
    %70 = arith.mulf %69, %68 : vector<128x128xf32>
    %71 = arith.addf %65, %70 : vector<128x128xf32>
    %cst_27 = arith.constant 5.000000e-01 : f32
    %72 = vector.broadcast %cst_27 : f32 to vector<128x128xf32>
    %73 = arith.subf %71, %72 : vector<128x128xf32>
    %74 = vector.shape_cast %73 : vector<128x128xf32> to vector<1x128x128xf32>
    %cst_28 = arith.constant dense<0.000000e+00> : vector<1xf32>
    %75 = vector.multi_reduction <add>, %74, %cst_28 [1, 2] : vector<1x128x128xf32> to vector<1xf32>
    %76 = vector.shape_cast %75 : vector<1xf32> to vector<1x1x1xf32>
    %77 = vector.extract %76[0, 0, 0] : f32 from vector<1x1x1xf32>
    %78 = vector.broadcast %77 : f32 to vector<1x1xf32>
    %79 = arith.addf %62, %78 : vector<1x1xf32>
    %80 = math.log %36 : vector<1x128xf32>
    %cst_29 = arith.constant 0.000000e+00 : f32
    %81 = vector.broadcast %cst_29 : f32 to vector<1x128xf32>
    %82 = arith.subf %81, %80 : vector<1x128xf32>
    %83 = arith.mulf %36, %36 : vector<1x128xf32>
    %84 = arith.mulf %27, %27 : vector<1x128xf32>
    %85 = arith.addf %83, %84 : vector<1x128xf32>
    %cst_30 = arith.constant 5.000000e-01 : f32
    %86 = vector.broadcast %cst_30 : f32 to vector<1x128xf32>
    %87 = arith.mulf %86, %85 : vector<1x128xf32>
    %88 = arith.addf %82, %87 : vector<1x128xf32>
    %cst_31 = arith.constant 5.000000e-01 : f32
    %89 = vector.broadcast %cst_31 : f32 to vector<1x128xf32>
    %90 = arith.subf %88, %89 : vector<1x128xf32>
    %91 = vector.shape_cast %90 : vector<1x128xf32> to vector<1x1x128xf32>
    %cst_32 = arith.constant dense<0.000000e+00> : vector<1xf32>
    %92 = vector.multi_reduction <add>, %91, %cst_32 [1, 2] : vector<1x1x128xf32> to vector<1xf32>
    %93 = vector.shape_cast %92 : vector<1xf32> to vector<1x1x1xf32>
    %94 = vector.extract %93[0, 0, 0] : f32 from vector<1x1x1xf32>
    %95 = vector.broadcast %94 : f32 to vector<1x1xf32>
    %96 = arith.addf %79, %95 : vector<1x1xf32>
    %97 = math.log %40 : vector<1x128xf32>
    %cst_33 = arith.constant 0.000000e+00 : f32
    %98 = vector.broadcast %cst_33 : f32 to vector<1x128xf32>
    %99 = arith.subf %98, %97 : vector<1x128xf32>
    %100 = arith.mulf %40, %40 : vector<1x128xf32>
    %101 = arith.mulf %30, %30 : vector<1x128xf32>
    %102 = arith.addf %100, %101 : vector<1x128xf32>
    %cst_34 = arith.constant 5.000000e-01 : f32
    %103 = vector.broadcast %cst_34 : f32 to vector<1x128xf32>
    %104 = arith.mulf %103, %102 : vector<1x128xf32>
    %105 = arith.addf %99, %104 : vector<1x128xf32>
    %cst_35 = arith.constant 5.000000e-01 : f32
    %106 = vector.broadcast %cst_35 : f32 to vector<1x128xf32>
    %107 = arith.subf %105, %106 : vector<1x128xf32>
    %108 = vector.shape_cast %107 : vector<1x128xf32> to vector<1x1x128xf32>
    %cst_36 = arith.constant dense<0.000000e+00> : vector<1xf32>
    %109 = vector.multi_reduction <add>, %108, %cst_36 [1, 2] : vector<1x1x128xf32> to vector<1xf32>
    %110 = vector.shape_cast %109 : vector<1xf32> to vector<1x1x1xf32>
    %111 = vector.extract %110[0, 0, 0] : f32 from vector<1x1x1xf32>
    %112 = vector.broadcast %111 : f32 to vector<1x1xf32>
    %113 = arith.addf %96, %112 : vector<1x1xf32>
    %c0_37 = arith.constant 0 : index
    %c0_38 = arith.constant 0 : index
    %114 = vector.load %arg5[%c0_37, %c0_38] : memref<1x1xf32, #tpu.memory_space<vmem>>, vector<1x1xf32>
    tpu.vector_store %arg5[%c0_37, %c0_38], %113 {strides = array<i32>} : memref<1x1xf32, #tpu.memory_space<vmem>>, vector<1x1xf32>,
    return
  }
  func.func @transform_0(%arg0: i32) -> (i32, i32, i32) {
    %c0_i32 = arith.constant 0 : i32
    %c0_i32_0 = arith.constant 0 : i32
    %c0_i32_1 = arith.constant 0 : i32
    %c0_i32_2 = arith.constant 0 : i32
    return %c0_i32, %c0_i32_0, %c0_i32_1 : i32, i32, i32
  }
  func.func @transform_1(%arg0: i32) -> (i32, i32) {
    %c0_i32 = arith.constant 0 : i32
    %c0_i32_0 = arith.constant 0 : i32
    %c0_i32_1 = arith.constant 0 : i32
    return %c0_i32, %c0_i32_0 : i32, i32
  }
  func.func @transform_2(%arg0: i32) -> (i32, i32) {
    %c0_i32 = arith.constant 0 : i32
    %c0_i32_0 = arith.constant 0 : i32
    %c0_i32_1 = arith.constant 0 : i32
    return %c0_i32, %c0_i32_0 : i32, i32
  }
  func.func @transform_3(%arg0: i32) -> (i32, i32) {
    %c0_i32 = arith.constant 0 : i32
    %c0_i32_0 = arith.constant 0 : i32
    %c0_i32_1 = arith.constant 0 : i32
    return %c0_i32, %c0_i32_0 : i32, i32
  }
  func.func @transform_4(%arg0: i32) -> (i32, i32) {
    %c0_i32 = arith.constant 0 : i32
    %c0_i32_0 = arith.constant 0 : i32
    %c0_i32_1 = arith.constant 0 : i32
    return %c0_i32, %c0_i32_0 : i32, i32
  }
}

</mosaic_0001>

<llo_original>
// kernel: tpu_custom_call.1
$region0: #{tpu_custom_call.1}
  #allocation0 [shape = 'u32[]', space=smem, size = 0x4, offset = 0x4, fixed_abs, tag = 'smem constant byte address 0x4 - core index']
  #allocation1 [shape = 'u32[144,128]{1,0:T(1,128)}', space=vmem, size = 0x12000, scoped, tag = 'internal scratch']
  %s0 = inlined_call_operand.hbm [shape: f32[6,128,128], index: 0, kind: input, shape index: {}]
  %s1 = inlined_call_operand.hbm [shape: f32[8,128], index: 1, kind: input, shape index: {}]
  %s2 = inlined_call_operand.hbm [shape: f32[128,128], index: 2, kind: output, shape index: {0}]
  %s3 = inlined_call_operand.hbm [shape: f32[1,128], index: 3, kind: output, shape index: {1}]
  %s4 = inlined_call_operand.hbm [shape: f32[1,1], index: 4, kind: output, shape index: {2}]
  %5 = xla_tuple %s2, %s3, %s4
  %s6 = sld [smem:[#allocation0]]
  $region42: #{tpu_custom_call.1} parent=0
    _
  %s8 = ssub.s32 1, %s6
  %s9 = scalar_select 0, %s8, %s6
  $region1: #{tpu_custom_call.1} parent=0
    #allocation2 [shape = 'u8[393216]{0}', space=vmem, size = 0x60000, scoped, tag = 'input window, operand 0, single buffered']
    #allocation3 [shape = 's32[1]{0}', space=sflag, size = 0x4, scoped, tag = 'scoped memory for tpu_custom_call.1']
    #allocation4 [shape = 's32[1]{0}', space=sflag, size = 0x4, scoped, tag = 'scoped memory for tpu_custom_call.1']
    #allocation5 [shape = 'u8[4096]{0}', space=vmem, size = 0x1000, scoped, tag = 'input window, operand 1, single buffered']
    #allocation6 [shape = 's32[1]{0}', space=sflag, size = 0x4, scoped, tag = 'scoped memory for tpu_custom_call.1']
    #allocation7 [shape = 'u8[65536]{0}', space=vmem, size = 0x10000, scoped, tag = 'output window, operand 0, single buffered']
    #allocation8 [shape = 'u8[512]{0}', space=vmem, size = 0x400, scoped, tag = 'output window, operand 1, single buffered']
    #allocation9 [shape = 's32[1]{0}', space=sflag, size = 0x4, scoped, tag = 'scoped memory for tpu_custom_call.1']
    #allocation10 [shape = 'u8[512]{0}', space=vmem, size = 0x400, scoped, tag = 'output window, operand 2, single buffered']
    %10 = vsyncpa [#allocation3], 0
    %11 = vsyncpa [#allocation6], 0
    %12 = vsyncpa [#allocation4], 0
    %13 = vsyncpa [#allocation9], 0
    // Predicated region
    $region2: #{tpu_custom_call.1} parent=1 // pred_check
      _
    $region3: #{tpu_custom_call.1} parent=1 // pred_check_branch
      %15 = sbr.rel (0) target = $region5
    $region4: #{tpu_custom_call.1} parent=1 // pred_region
      %s17 = ssub.s32 12288, 12288
      %18 = vsyncadd [#allocation3], %s17
      %s19 = sshll.u32 [#allocation2], 4
      %s20 = int_to_ptr.vmem [resolvable:$true] %s19
      %25 = dma.hbm_to_vmem [thread:$0]  %s0, 12288, %s20, [#allocation3], 128, 128, 8
    $region5: #{tpu_custom_call.1} parent=1 // pred_fallthru
      _
    // Predicated region
    $region6: #{tpu_custom_call.1} parent=1 // pred_check
      _
    $region7: #{tpu_custom_call.1} parent=1 // pred_check_branch
      %27 = sbr.rel (0) target = $region9
    $region8: #{tpu_custom_call.1} parent=1 // pred_region
      %s29 = ssub.s32 128, 128
      %30 = vsyncadd [#allocation6], %s29
      %s32 = sshll.u32 [#allocation5], 4
      %s33 = int_to_ptr.vmem [resolvable:$true] %s32
      %35 = dma.hbm_to_vmem [thread:$0]  %s1, 128, %s33, [#allocation6]
    $region9: #{tpu_custom_call.1} parent=1 // pred_fallthru
      _
    // Predicated region
    $region10: #{tpu_custom_call.1} parent=1 // pred_check
      _
    $region11: #{tpu_custom_call.1} parent=1 // pred_check_branch
      %37 = sbr.rel (0) target = $region13
    $region12: #{tpu_custom_call.1} parent=1 // pred_region
      %38 = dma.done [#allocation3], 12288
    $region13: #{tpu_custom_call.1} parent=1 // pred_fallthru
      _
    // Predicated region
    $region14: #{tpu_custom_call.1} parent=1 // pred_check
      _
    $region15: #{tpu_custom_call.1} parent=1 // pred_check_branch
      %40 = sbr.rel (0) target = $region17
    $region16: #{tpu_custom_call.1} parent=1 // pred_region
      %41 = dma.done [#allocation6], 128
    $region17: #{tpu_custom_call.1} parent=1 // pred_fallthru
      _
    %v42 = vld [vmem:[#allocation2] sm:$0xff]
    %v43 = vld [vmem:[#allocation2 + $0x8] sm:$0xff]
    %v44 = vld [vmem:[#allocation2 + $0x10] sm:$0xff]
    %v45 = vld [vmem:[#allocation2 + $0x18] sm:$0xff]
    %v46 = vld [vmem:[#allocation2 + $0x20] sm:$0xff]
    %v47 = vld [vmem:[#allocation2 + $0x28] sm:$0xff]
    %v48 = vld [vmem:[#allocation2 + $0x30] sm:$0xff]
    %v49 = vld [vmem:[#allocation2 + $0x38] sm:$0xff]
    %v50 = vld [vmem:[#allocation2 + $0x40] sm:$0xff]
    %v51 = vld [vmem:[#allocation2 + $0x48] sm:$0xff]
    %v52 = vld [vmem:[#allocation2 + $0x50] sm:$0xff]
    %v53 = vld [vmem:[#allocation2 + $0x58] sm:$0xff]
    %v54 = vld [vmem:[#allocation2 + $0x60] sm:$0xff]
    %v55 = vld [vmem:[#allocation2 + $0x68] sm:$0xff]
    %v56 = vld [vmem:[#allocation2 + $0x70] sm:$0xff]
    %v57 = vld [vmem:[#allocation2 + $0x78] sm:$0xff]
    %s58 = scalar_lea.vmem [#allocation2], 128
    %v59 = vld [vmem:[%s58] sm:$0xff]
    %v60 = vld [vmem:[%s58 + $0x8] sm:$0xff]
    %v61 = vld [vmem:[%s58 + $0x10] sm:$0xff]
    %v62 = vld [vmem:[%s58 + $0x18] sm:$0xff]
    %v63 = vld [vmem:[%s58 + $0x20] sm:$0xff]
    %v64 = vld [vmem:[%s58 + $0x28] sm:$0xff]
    %v65 = vld [vmem:[%s58 + $0x30] sm:$0xff]
    %v66 = vld [vmem:[%s58 + $0x38] sm:$0xff]
    %v67 = vld [vmem:[%s58 + $0x40] sm:$0xff]
    %v68 = vld [vmem:[%s58 + $0x48] sm:$0xff]
    %v69 = vld [vmem:[%s58 + $0x50] sm:$0xff]
    %v70 = vld [vmem:[%s58 + $0x58] sm:$0xff]
    %v71 = vld [vmem:[%s58 + $0x60] sm:$0xff]
    %v72 = vld [vmem:[%s58 + $0x68] sm:$0xff]
    %v73 = vld [vmem:[%s58 + $0x70] sm:$0xff]
    %v74 = vld [vmem:[%s58 + $0x78] sm:$0xff]
    %s75 = scalar_lea.vmem [#allocation2], 256
    %v76 = vld [vmem:[%s75] sm:$0xff]
    %v77 = vld [vmem:[%s75 + $0x8] sm:$0xff]
    %v78 = vld [vmem:[%s75 + $0x10] sm:$0xff]
    %v79 = vld [vmem:[%s75 + $0x18] sm:$0xff]
    %v80 = vld [vmem:[%s75 + $0x20] sm:$0xff]
    %v81 = vld [vmem:[%s75 + $0x28] sm:$0xff]
    %v82 = vld [vmem:[%s75 + $0x30] sm:$0xff]
    %v83 = vld [vmem:[%s75 + $0x38] sm:$0xff]
    %v84 = vld [vmem:[%s75 + $0x40] sm:$0xff]
    %v85 = vld [vmem:[%s75 + $0x48] sm:$0xff]
    %v86 = vld [vmem:[%s75 + $0x50] sm:$0xff]
    %v87 = vld [vmem:[%s75 + $0x58] sm:$0xff]
    %v88 = vld [vmem:[%s75 + $0x60] sm:$0xff]
    %v89 = vld [vmem:[%s75 + $0x68] sm:$0xff]
    %v90 = vld [vmem:[%s75 + $0x70] sm:$0xff]
    %v91 = vld [vmem:[%s75 + $0x78] sm:$0xff]
    %s92 = scalar_lea.vmem [#allocation2], 384
    %v93 = vld [vmem:[%s92] sm:$0xff]
    %v94 = vld [vmem:[%s92 + $0x8] sm:$0xff]
    %v95 = vld [vmem:[%s92 + $0x10] sm:$0xff]
    %v96 = vld [vmem:[%s92 + $0x18] sm:$0xff]
    %v97 = vld [vmem:[%s92 + $0x20] sm:$0xff]
    %v98 = vld [vmem:[%s92 + $0x28] sm:$0xff]
    %v99 = vld [vmem:[%s92 + $0x30] sm:$0xff]
    %v100 = vld [vmem:[%s92 + $0x38] sm:$0xff]
    %v101 = vld [vmem:[%s92 + $0x40] sm:$0xff]
    %v102 = vld [vmem:[%s92 + $0x48] sm:$0xff]
    %v103 = vld [vmem:[%s92 + $0x50] sm:$0xff]
    %v104 = vld [vmem:[%s92 + $0x58] sm:$0xff]
    %v105 = vld [vmem:[%s92 + $0x60] sm:$0xff]
    %v106 = vld [vmem:[%s92 + $0x68] sm:$0xff]
    %v107 = vld [vmem:[%s92 + $0x70] sm:$0xff]
    %v108 = vld [vmem:[%s92 + $0x78] sm:$0xff]
    %s109 = scalar_lea.vmem [#allocation2], 512
    %v110 = vld [vmem:[%s109] sm:$0xff]
    %v111 = vld [vmem:[%s109 + $0x8] sm:$0xff]
    %v112 = vld [vmem:[%s109 + $0x10] sm:$0xff]
    %v113 = vld [vmem:[%s109 + $0x18] sm:$0xff]
    %v114 = vld [vmem:[%s109 + $0x20] sm:$0xff]
    %v115 = vld [vmem:[%s109 + $0x28] sm:$0xff]
    %v116 = vld [vmem:[%s109 + $0x30] sm:$0xff]
    %v117 = vld [vmem:[%s109 + $0x38] sm:$0xff]
    %v118 = vld [vmem:[%s109 + $0x40] sm:$0xff]
    %v119 = vld [vmem:[%s109 + $0x48] sm:$0xff]
    %v120 = vld [vmem:[%s109 + $0x50] sm:$0xff]
    %v121 = vld [vmem:[%s109 + $0x58] sm:$0xff]
    %v122 = vld [vmem:[%s109 + $0x60] sm:$0xff]
    %v123 = vld [vmem:[%s109 + $0x68] sm:$0xff]
    %v124 = vld [vmem:[%s109 + $0x70] sm:$0xff]
    %v125 = vld [vmem:[%s109 + $0x78] sm:$0xff]
    %s126 = scalar_lea.vmem [#allocation2], 640
    %v127 = vld [vmem:[%s126] sm:$0xff]
    %v128 = vld [vmem:[%s126 + $0x8] sm:$0xff]
    %v129 = vld [vmem:[%s126 + $0x10] sm:$0xff]
    %v130 = vld [vmem:[%s126 + $0x18] sm:$0xff]
    %v131 = vld [vmem:[%s126 + $0x20] sm:$0xff]
    %v132 = vld [vmem:[%s126 + $0x28] sm:$0xff]
    %v133 = vld [vmem:[%s126 + $0x30] sm:$0xff]
    %v134 = vld [vmem:[%s126 + $0x38] sm:$0xff]
    %v135 = vld [vmem:[%s126 + $0x40] sm:$0xff]
    %v136 = vld [vmem:[%s126 + $0x48] sm:$0xff]
    %v137 = vld [vmem:[%s126 + $0x50] sm:$0xff]
    %v138 = vld [vmem:[%s126 + $0x58] sm:$0xff]
    %v139 = vld [vmem:[%s126 + $0x60] sm:$0xff]
    %v140 = vld [vmem:[%s126 + $0x68] sm:$0xff]
    %v141 = vld [vmem:[%s126 + $0x70] sm:$0xff]
    %v142 = vld [vmem:[%s126 + $0x78] sm:$0xff]
    %v143 = vmul.f32 %v59, 1.442695
    %v144 = vpow.pop %v143
    %v145 = vmul.f32 %v60, 1.442695
    %v146 = vpow.pop %v145
    %v147 = vmul.f32 %v61, 1.442695
    %v148 = vpow.pop %v147
    %v149 = vmul.f32 %v62, 1.442695
    %v150 = vpow.pop %v149
    %v151 = vmul.f32 %v63, 1.442695
    %v152 = vpow.pop %v151
    %v153 = vmul.f32 %v64, 1.442695
    %v154 = vpow.pop %v153
    %v155 = vmul.f32 %v65, 1.442695
    %v156 = vpow.pop %v155
    %v157 = vmul.f32 %v66, 1.442695
    %v158 = vpow.pop %v157
    %v159 = vmul.f32 %v67, 1.442695
    %v160 = vpow.pop %v159
    %v161 = vmul.f32 %v68, 1.442695
    %v162 = vpow.pop %v161
    %v163 = vmul.f32 %v69, 1.442695
    %v164 = vpow.pop %v163
    %v165 = vmul.f32 %v70, 1.442695
    %v166 = vpow.pop %v165
    %v167 = vmul.f32 %v71, 1.442695
    %v168 = vpow.pop %v167
    %v169 = vmul.f32 %v72, 1.442695
    %v170 = vpow.pop %v169
    %v171 = vmul.f32 %v73, 1.442695
    %v172 = vpow.pop %v171
    %v173 = vmul.f32 %v74, 1.442695
    %v174 = vpow.pop %v173
    %v175 = vadd.f32 %v144, 1.0
    %v176 = vadd.f32 %v146, 1.0
    %v177 = vadd.f32 %v148, 1.0
    %v178 = vadd.f32 %v150, 1.0
    %v179 = vadd.f32 %v152, 1.0
    %v180 = vadd.f32 %v154, 1.0
    %v181 = vadd.f32 %v156, 1.0
    %v182 = vadd.f32 %v158, 1.0
    %v183 = vadd.f32 %v160, 1.0
    %v184 = vadd.f32 %v162, 1.0
    %v185 = vadd.f32 %v164, 1.0
    %v186 = vadd.f32 %v166, 1.0
    %v187 = vadd.f32 %v168, 1.0
    %v188 = vadd.f32 %v170, 1.0
    %v189 = vadd.f32 %v172, 1.0
    %v190 = vadd.f32 %v174, 1.0
    %v191 = vlog2.pop %v175
    %v192 = vmul.f32 %v191, 0.6931472
    %v193 = vlog2.pop %v176
    %v194 = vmul.f32 %v193, 0.6931472
    %v195 = vlog2.pop %v177
    %v196 = vmul.f32 %v195, 0.6931472
    %v197 = vlog2.pop %v178
    %v198 = vmul.f32 %v197, 0.6931472
    %v199 = vlog2.pop %v179
    %v200 = vmul.f32 %v199, 0.6931472
    %v201 = vlog2.pop %v180
    %v202 = vmul.f32 %v201, 0.6931472
    %v203 = vlog2.pop %v181
    %v204 = vmul.f32 %v203, 0.6931472
    %v205 = vlog2.pop %v182
    %v206 = vmul.f32 %v205, 0.6931472
    %v207 = vlog2.pop %v183
    %v208 = vmul.f32 %v207, 0.6931472
    %v209 = vlog2.pop %v184
    %v210 = vmul.f32 %v209, 0.6931472
    %v211 = vlog2.pop %v185
    %v212 = vmul.f32 %v211, 0.6931472
    %v213 = vlog2.pop %v186
    %v214 = vmul.f32 %v213, 0.6931472
    %v215 = vlog2.pop %v187
    %v216 = vmul.f32 %v215, 0.6931472
    %v217 = vlog2.pop %v188
    %v218 = vmul.f32 %v217, 0.6931472
    %v219 = vlog2.pop %v189
    %v220 = vmul.f32 %v219, 0.6931472
    %v221 = vlog2.pop %v190
    %v222 = vmul.f32 %v221, 0.6931472
    %v223 = vmul.f32 %v110, 1.442695
    %v224 = vpow.pop %v223
    %v225 = vmul.f32 %v111, 1.442695
    %v226 = vpow.pop %v225
    %v227 = vmul.f32 %v112, 1.442695
    %v228 = vpow.pop %v227
    %v229 = vmul.f32 %v113, 1.442695
    %v230 = vpow.pop %v229
    %v231 = vmul.f32 %v114, 1.442695
    %v232 = vpow.pop %v231
    %v233 = vmul.f32 %v115, 1.442695
    %v234 = vpow.pop %v233
    %v235 = vmul.f32 %v116, 1.442695
    %v236 = vpow.pop %v235
    %v237 = vmul.f32 %v117, 1.442695
    %v238 = vpow.pop %v237
    %v239 = vmul.f32 %v118, 1.442695
    %v240 = vpow.pop %v239
    %v241 = vmul.f32 %v119, 1.442695
    %v242 = vpow.pop %v241
    %v243 = vmul.f32 %v120, 1.442695
    %v244 = vpow.pop %v243
    %v245 = vmul.f32 %v121, 1.442695
    %v246 = vpow.pop %v245
    %v247 = vmul.f32 %v122, 1.442695
    %v248 = vpow.pop %v247
    %v249 = vmul.f32 %v123, 1.442695
    %v250 = vpow.pop %v249
    %v251 = vmul.f32 %v124, 1.442695
    %v252 = vpow.pop %v251
    %v253 = vmul.f32 %v125, 1.442695
    %v254 = vpow.pop %v253
    %v255 = vadd.f32 %v224, 1.0
    %v256 = vadd.f32 %v226, 1.0
    %v257 = vadd.f32 %v228, 1.0
    %v258 = vadd.f32 %v230, 1.0
    %v259 = vadd.f32 %v232, 1.0
    %v260 = vadd.f32 %v234, 1.0
    %v261 = vadd.f32 %v236, 1.0
    %v262 = vadd.f32 %v238, 1.0
    %v263 = vadd.f32 %v240, 1.0
    %v264 = vadd.f32 %v242, 1.0
    %v265 = vadd.f32 %v244, 1.0
    %v266 = vadd.f32 %v246, 1.0
    %v267 = vadd.f32 %v248, 1.0
    %v268 = vadd.f32 %v250, 1.0
    %v269 = vadd.f32 %v252, 1.0
    %v270 = vadd.f32 %v254, 1.0
    %v271 = vlog2.pop %v255
    %v272 = vmul.f32 %v271, 0.6931472
    %v273 = vlog2.pop %v256
    %v274 = vmul.f32 %v273, 0.6931472
    %v275 = vlog2.pop %v257
    %v276 = vmul.f32 %v275, 0.6931472
    %v277 = vlog2.pop %v258
    %v278 = vmul.f32 %v277, 0.6931472
    %v279 = vlog2.pop %v259
    %v280 = vmul.f32 %v279, 0.6931472
    %v281 = vlog2.pop %v260
    %v282 = vmul.f32 %v281, 0.6931472
    %v283 = vlog2.pop %v261
    %v284 = vmul.f32 %v283, 0.6931472
    %v285 = vlog2.pop %v262
    %v286 = vmul.f32 %v285, 0.6931472
    %v287 = vlog2.pop %v263
    %v288 = vmul.f32 %v287, 0.6931472
    %v289 = vlog2.pop %v264
    %v290 = vmul.f32 %v289, 0.6931472
    %v291 = vlog2.pop %v265
    %v292 = vmul.f32 %v291, 0.6931472
    %v293 = vlog2.pop %v266
    %v294 = vmul.f32 %v293, 0.6931472
    %v295 = vlog2.pop %v267
    %v296 = vmul.f32 %v295, 0.6931472
    %v297 = vlog2.pop %v268
    %v298 = vmul.f32 %v297, 0.6931472
    %v299 = vlog2.pop %v269
    %v300 = vmul.f32 %v299, 0.6931472
    %v301 = vlog2.pop %v270
    %v302 = vmul.f32 %v301, 0.6931472
    %v303 = vmul.f32 %v192, %v76
    %v304 = vmul.f32 %v194, %v77
    %v305 = vmul.f32 %v196, %v78
    %v306 = vmul.f32 %v198, %v79
    %v307 = vmul.f32 %v200, %v80
    %v308 = vmul.f32 %v202, %v81
    %v309 = vmul.f32 %v204, %v82
    %v310 = vmul.f32 %v206, %v83
    %v311 = vmul.f32 %v208, %v84
    %v312 = vmul.f32 %v210, %v85
    %v313 = vmul.f32 %v212, %v86
    %v314 = vmul.f32 %v214, %v87
    %v315 = vmul.f32 %v216, %v88
    %v316 = vmul.f32 %v218, %v89
    %v317 = vmul.f32 %v220, %v90
    %v318 = vmul.f32 %v222, %v91
    %v319 = vadd.f32 %v42, %v303
    %v320 = vadd.f32 %v43, %v304
    %v321 = vadd.f32 %v44, %v305
    %v322 = vadd.f32 %v45, %v306
    %v323 = vadd.f32 %v46, %v307
    %v324 = vadd.f32 %v47, %v308
    %v325 = vadd.f32 %v48, %v309
    %v326 = vadd.f32 %v49, %v310
    %v327 = vadd.f32 %v50, %v311
    %v328 = vadd.f32 %v51, %v312
    %v329 = vadd.f32 %v52, %v313
    %v330 = vadd.f32 %v53, %v314
    %v331 = vadd.f32 %v54, %v315
    %v332 = vadd.f32 %v55, %v316
    %v333 = vadd.f32 %v56, %v317
    %v334 = vadd.f32 %v57, %v318
    %v335 = vmul.f32 %v272, %v127
    %v336 = vmul.f32 %v274, %v128
    %v337 = vmul.f32 %v276, %v129
    %v338 = vmul.f32 %v278, %v130
    %v339 = vmul.f32 %v280, %v131
    %v340 = vmul.f32 %v282, %v132
    %v341 = vmul.f32 %v284, %v133
    %v342 = vmul.f32 %v286, %v134
    %v343 = vmul.f32 %v288, %v135
    %v344 = vmul.f32 %v290, %v136
    %v345 = vmul.f32 %v292, %v137
    %v346 = vmul.f32 %v294, %v138
    %v347 = vmul.f32 %v296, %v139
    %v348 = vmul.f32 %v298, %v140
    %v349 = vmul.f32 %v300, %v141
    %v350 = vmul.f32 %v302, %v142
    %v351 = vadd.f32 %v93, %v335
    %v352 = vadd.f32 %v94, %v336
    %v353 = vadd.f32 %v95, %v337
    %v354 = vadd.f32 %v96, %v338
    %v355 = vadd.f32 %v97, %v339
    %v356 = vadd.f32 %v98, %v340
    %v357 = vadd.f32 %v99, %v341
    %v358 = vadd.f32 %v100, %v342
    %v359 = vadd.f32 %v101, %v343
    %v360 = vadd.f32 %v102, %v344
    %v361 = vadd.f32 %v103, %v345
    %v362 = vadd.f32 %v104, %v346
    %v363 = vadd.f32 %v105, %v347
    %v364 = vadd.f32 %v106, %v348
    %v365 = vadd.f32 %v107, %v349
    %v366 = vadd.f32 %v108, %v350
    %v367 = vadd.f32 %v319, %v351
    %v368 = vadd.f32 %v320, %v352
    %v369 = vadd.f32 %v321, %v353
    %v370 = vadd.f32 %v322, %v354
    %v371 = vadd.f32 %v323, %v355
    %v372 = vadd.f32 %v324, %v356
    %v373 = vadd.f32 %v325, %v357
    %v374 = vadd.f32 %v326, %v358
    %v375 = vadd.f32 %v327, %v359
    %v376 = vadd.f32 %v328, %v360
    %v377 = vadd.f32 %v329, %v361
    %v378 = vadd.f32 %v330, %v362
    %v379 = vadd.f32 %v331, %v363
    %v380 = vadd.f32 %v332, %v364
    %v381 = vadd.f32 %v333, %v365
    %v382 = vadd.f32 %v334, %v366
    %383 = vst [vmem:[#allocation7] sm:$0xff] %v367
    %384 = vst [vmem:[#allocation7 + $0x8] sm:$0xff] %v368
    %385 = vst [vmem:[#allocation7 + $0x10] sm:$0xff] %v369
    %386 = vst [vmem:[#allocation7 + $0x18] sm:$0xff] %v370
    %387 = vst [vmem:[#allocation7 + $0x20] sm:$0xff] %v371
    %388 = vst [vmem:[#allocation7 + $0x28] sm:$0xff] %v372
    %389 = vst [vmem:[#allocation7 + $0x30] sm:$0xff] %v373
    %390 = vst [vmem:[#allocation7 + $0x38] sm:$0xff] %v374
    %391 = vst [vmem:[#allocation7 + $0x40] sm:$0xff] %v375
    %392 = vst [vmem:[#allocation7 + $0x48] sm:$0xff] %v376
    %393 = vst [vmem:[#allocation7 + $0x50] sm:$0xff] %v377
    %394 = vst [vmem:[#allocation7 + $0x58] sm:$0xff] %v378
    %395 = vst [vmem:[#allocation7 + $0x60] sm:$0xff] %v379
    %396 = vst [vmem:[#allocation7 + $0x68] sm:$0xff] %v380
    %397 = vst [vmem:[#allocation7 + $0x70] sm:$0xff] %v381
    %398 = vst [vmem:[#allocation7 + $0x78] sm:$0xff] %v382
    %v399 = vld [vmem:[#allocation5] sm:$0xff]
    %v400 = vmul.f32 %v399, 1.442695
    %v401 = vpow.pop %v400
    %v402 = vadd.f32 %v401, 1.0
    %v403 = vlog2.pop %v402
    %v404 = vmul.f32 %v403, 0.6931472
    %v406 = vrot.slane %v399, 1
    %v408 = vmul.f32 %v404, %v406
    %v410 = vrot.slane %v408, 1
    %v412 = vadd.f32 %v399, %v410
    %v414 = vrot.slane %v412, 3
    %v416 = vadd.f32 %v412, %v414
    %417 = vst [vmem:[#allocation8] sm:$0x1] %v416
    %v418 = vlog2.pop %v192
    %v419 = vmul.f32 %v418, 0.6931472
    %v420 = vlog2.pop %v194
    %v421 = vmul.f32 %v420, 0.6931472
    %v422 = vlog2.pop %v196
    %v423 = vmul.f32 %v422, 0.6931472
    %v424 = vlog2.pop %v198
    %v425 = vmul.f32 %v424, 0.6931472
    %v426 = vlog2.pop %v200
    %v427 = vmul.f32 %v426, 0.6931472
    %v428 = vlog2.pop %v202
    %v429 = vmul.f32 %v428, 0.6931472
    %v430 = vlog2.pop %v204
    %v431 = vmul.f32 %v430, 0.6931472
    %v432 = vlog2.pop %v206
    %v433 = vmul.f32 %v432, 0.6931472
    %v434 = vlog2.pop %v208
    %v435 = vmul.f32 %v434, 0.6931472
    %v436 = vlog2.pop %v210
    %v437 = vmul.f32 %v436, 0.6931472
    %v438 = vlog2.pop %v212
    %v439 = vmul.f32 %v438, 0.6931472
    %v440 = vlog2.pop %v214
    %v441 = vmul.f32 %v440, 0.6931472
    %v442 = vlog2.pop %v216
    %v443 = vmul.f32 %v442, 0.6931472
    %v444 = vlog2.pop %v218
    %v445 = vmul.f32 %v444, 0.6931472
    %v446 = vlog2.pop %v220
    %v447 = vmul.f32 %v446, 0.6931472
    %v448 = vlog2.pop %v222
    %v449 = vmul.f32 %v448, 0.6931472
    %v450 = vsub.f32 0.0, %v419
    %v451 = vsub.f32 0.0, %v421
    %v452 = vsub.f32 0.0, %v423
    %v453 = vsub.f32 0.0, %v425
    %v454 = vsub.f32 0.0, %v427
    %v455 = vsub.f32 0.0, %v429
    %v456 = vsub.f32 0.0, %v431
    %v457 = vsub.f32 0.0, %v433
    %v458 = vsub.f32 0.0, %v435
    %v459 = vsub.f32 0.0, %v437
    %v460 = vsub.f32 0.0, %v439
    %v461 = vsub.f32 0.0, %v441
    %v462 = vsub.f32 0.0, %v443
    %v463 = vsub.f32 0.0, %v445
    %v464 = vsub.f32 0.0, %v447
    %v465 = vsub.f32 0.0, %v449
    %v466 = vmul.f32 %v192, %v192
    %v467 = vmul.f32 %v194, %v194
    %v468 = vmul.f32 %v196, %v196
    %v469 = vmul.f32 %v198, %v198
    %v470 = vmul.f32 %v200, %v200
    %v471 = vmul.f32 %v202, %v202
    %v472 = vmul.f32 %v204, %v204
    %v473 = vmul.f32 %v206, %v206
    %v474 = vmul.f32 %v208, %v208
    %v475 = vmul.f32 %v210, %v210
    %v476 = vmul.f32 %v212, %v212
    %v477 = vmul.f32 %v214, %v214
    %v478 = vmul.f32 %v216, %v216
    %v479 = vmul.f32 %v218, %v218
    %v480 = vmul.f32 %v220, %v220
    %v481 = vmul.f32 %v222, %v222
    %v482 = vmul.f32 %v42, %v42
    %v483 = vmul.f32 %v43, %v43
    %v484 = vmul.f32 %v44, %v44
    %v485 = vmul.f32 %v45, %v45
    %v486 = vmul.f32 %v46, %v46
    %v487 = vmul.f32 %v47, %v47
    %v488 = vmul.f32 %v48, %v48
    %v489 = vmul.f32 %v49, %v49
    %v490 = vmul.f32 %v50, %v50
    %v491 = vmul.f32 %v51, %v51
    %v492 = vmul.f32 %v52, %v52
    %v493 = vmul.f32 %v53, %v53
    %v494 = vmul.f32 %v54, %v54
    %v495 = vmul.f32 %v55, %v55
    %v496 = vmul.f32 %v56, %v56
    %v497 = vmul.f32 %v57, %v57
    %v498 = vadd.f32 %v466, %v482
    %v499 = vadd.f32 %v467, %v483
    %v500 = vadd.f32 %v468, %v484
    %v501 = vadd.f32 %v469, %v485
    %v502 = vadd.f32 %v470, %v486
    %v503 = vadd.f32 %v471, %v487
    %v504 = vadd.f32 %v472, %v488
    %v505 = vadd.f32 %v473, %v489
    %v506 = vadd.f32 %v474, %v490
    %v507 = vadd.f32 %v475, %v491
    %v508 = vadd.f32 %v476, %v492
    %v509 = vadd.f32 %v477, %v493
    %v510 = vadd.f32 %v478, %v494
    %v511 = vadd.f32 %v479, %v495
    %v512 = vadd.f32 %v480, %v496
    %v513 = vadd.f32 %v481, %v497
    %v514 = vmul.f32 %v498, 0.5
    %v515 = vmul.f32 %v499, 0.5
    %v516 = vmul.f32 %v500, 0.5
    %v517 = vmul.f32 %v501, 0.5
    %v518 = vmul.f32 %v502, 0.5
    %v519 = vmul.f32 %v503, 0.5
    %v520 = vmul.f32 %v504, 0.5
    %v521 = vmul.f32 %v505, 0.5
    %v522 = vmul.f32 %v506, 0.5
    %v523 = vmul.f32 %v507, 0.5
    %v524 = vmul.f32 %v508, 0.5
    %v525 = vmul.f32 %v509, 0.5
    %v526 = vmul.f32 %v510, 0.5
    %v527 = vmul.f32 %v511, 0.5
    %v528 = vmul.f32 %v512, 0.5
    %v529 = vmul.f32 %v513, 0.5
    %v530 = vadd.f32 %v450, %v514
    %v531 = vadd.f32 %v451, %v515
    %v532 = vadd.f32 %v452, %v516
    %v533 = vadd.f32 %v453, %v517
    %v534 = vadd.f32 %v454, %v518
    %v535 = vadd.f32 %v455, %v519
    %v536 = vadd.f32 %v456, %v520
    %v537 = vadd.f32 %v457, %v521
    %v538 = vadd.f32 %v458, %v522
    %v539 = vadd.f32 %v459, %v523
    %v540 = vadd.f32 %v460, %v524
    %v541 = vadd.f32 %v461, %v525
    %v542 = vadd.f32 %v462, %v526
    %v543 = vadd.f32 %v463, %v527
    %v544 = vadd.f32 %v464, %v528
    %v545 = vadd.f32 %v465, %v529
    %v546 = vsub.f32 %v530, 0.5
    %v547 = vsub.f32 %v531, 0.5
    %v548 = vsub.f32 %v532, 0.5
    %v549 = vsub.f32 %v533, 0.5
    %v550 = vsub.f32 %v534, 0.5
    %v551 = vsub.f32 %v535, 0.5
    %v552 = vsub.f32 %v536, 0.5
    %v553 = vsub.f32 %v537, 0.5
    %v554 = vsub.f32 %v538, 0.5
    %v555 = vsub.f32 %v539, 0.5
    %v556 = vsub.f32 %v540, 0.5
    %v557 = vsub.f32 %v541, 0.5
    %v558 = vsub.f32 %v542, 0.5
    %v559 = vsub.f32 %v543, 0.5
    %v560 = vsub.f32 %v544, 0.5
    %v561 = vsub.f32 %v545, 0.5
    %v562 = vadd.f32 %v546, %v547
    %v563 = vadd.f32 %v562, %v548
    %v564 = vadd.f32 %v563, %v549
    %v565 = vadd.f32 %v564, %v550
    %v566 = vadd.f32 %v565, %v551
    %v567 = vadd.f32 %v566, %v552
    %v568 = vadd.f32 %v567, %v553
    %v569 = vadd.f32 %v568, %v554
    %v570 = vadd.f32 %v569, %v555
    %v571 = vadd.f32 %v570, %v556
    %v572 = vadd.f32 %v571, %v557
    %v573 = vadd.f32 %v572, %v558
    %v574 = vadd.f32 %v573, %v559
    %v575 = vadd.f32 %v574, %v560
    %v576 = vadd.f32 %v575, %v561
    %577 = vadd.xlane.f32.xlu0 %v576
    %v578 = vpop.xlane.xlu0 %577
    %v579 = vrot.slane %v578, 4
    %v580 = vadd.f32 %v578, %v579
    %v581 = vrot.slane %v580, 2
    %v582 = vadd.f32 %v580, %v581
    %v583 = vrot.slane %v582, 1
    %v584 = vadd.f32 %v582, %v583
    %s585 = vtos %v584
    %v586 = vstv %s585
    %v587 = vlog2.pop %v272
    %v588 = vmul.f32 %v587, 0.6931472
    %v589 = vlog2.pop %v274
    %v590 = vmul.f32 %v589, 0.6931472
    %v591 = vlog2.pop %v276
    %v592 = vmul.f32 %v591, 0.6931472
    %v593 = vlog2.pop %v278
    %v594 = vmul.f32 %v593, 0.6931472
    %v595 = vlog2.pop %v280
    %v596 = vmul.f32 %v595, 0.6931472
    %v597 = vlog2.pop %v282
    %v598 = vmul.f32 %v597, 0.6931472
    %v599 = vlog2.pop %v284
    %v600 = vmul.f32 %v599, 0.6931472
    %v601 = vlog2.pop %v286
    %v602 = vmul.f32 %v601, 0.6931472
    %v603 = vlog2.pop %v288
    %v604 = vmul.f32 %v603, 0.6931472
    %v605 = vlog2.pop %v290
    %v606 = vmul.f32 %v605, 0.6931472
    %v607 = vlog2.pop %v292
    %v608 = vmul.f32 %v607, 0.6931472
    %v609 = vlog2.pop %v294
    %v610 = vmul.f32 %v609, 0.6931472
    %v611 = vlog2.pop %v296
    %v612 = vmul.f32 %v611, 0.6931472
    %v613 = vlog2.pop %v298
    %v614 = vmul.f32 %v613, 0.6931472
    %v615 = vlog2.pop %v300
    %v616 = vmul.f32 %v615, 0.6931472
    %v617 = vlog2.pop %v302
    %v618 = vmul.f32 %v617, 0.6931472
    %v619 = vsub.f32 0.0, %v588
    %v620 = vsub.f32 0.0, %v590
    %v621 = vsub.f32 0.0, %v592
    %v622 = vsub.f32 0.0, %v594
    %v623 = vsub.f32 0.0, %v596
    %v624 = vsub.f32 0.0, %v598
    %v625 = vsub.f32 0.0, %v600
    %v626 = vsub.f32 0.0, %v602
    %v627 = vsub.f32 0.0, %v604
    %v628 = vsub.f32 0.0, %v606
    %v629 = vsub.f32 0.0, %v608
    %v630 = vsub.f32 0.0, %v610
    %v631 = vsub.f32 0.0, %v612
    %v632 = vsub.f32 0.0, %v614
    %v633 = vsub.f32 0.0, %v616
    %v634 = vsub.f32 0.0, %v618
    %v635 = vmul.f32 %v272, %v272
    %v636 = vmul.f32 %v274, %v274
    %v637 = vmul.f32 %v276, %v276
    %v638 = vmul.f32 %v278, %v278
    %v639 = vmul.f32 %v280, %v280
    %v640 = vmul.f32 %v282, %v282
    %v641 = vmul.f32 %v284, %v284
    %v642 = vmul.f32 %v286, %v286
    %v643 = vmul.f32 %v288, %v288
    %v644 = vmul.f32 %v290, %v290
    %v645 = vmul.f32 %v292, %v292
    %v646 = vmul.f32 %v294, %v294
    %v647 = vmul.f32 %v296, %v296
    %v648 = vmul.f32 %v298, %v298
    %v649 = vmul.f32 %v300, %v300
    %v650 = vmul.f32 %v302, %v302
    %v651 = vmul.f32 %v93, %v93
    %v652 = vmul.f32 %v94, %v94
    %v653 = vmul.f32 %v95, %v95
    %v654 = vmul.f32 %v96, %v96
    %v655 = vmul.f32 %v97, %v97
    %v656 = vmul.f32 %v98, %v98
    %v657 = vmul.f32 %v99, %v99
    %v658 = vmul.f32 %v100, %v100
    %v659 = vmul.f32 %v101, %v101
    %v660 = vmul.f32 %v102, %v102
    %v661 = vmul.f32 %v103, %v103
    %v662 = vmul.f32 %v104, %v104
    %v663 = vmul.f32 %v105, %v105
    %v664 = vmul.f32 %v106, %v106
    %v665 = vmul.f32 %v107, %v107
    %v666 = vmul.f32 %v108, %v108
    %v667 = vadd.f32 %v635, %v651
    %v668 = vadd.f32 %v636, %v652
    %v669 = vadd.f32 %v637, %v653
    %v670 = vadd.f32 %v638, %v654
    %v671 = vadd.f32 %v639, %v655
    %v672 = vadd.f32 %v640, %v656
    %v673 = vadd.f32 %v641, %v657
    %v674 = vadd.f32 %v642, %v658
    %v675 = vadd.f32 %v643, %v659
    %v676 = vadd.f32 %v644, %v660
    %v677 = vadd.f32 %v645, %v661
    %v678 = vadd.f32 %v646, %v662
    %v679 = vadd.f32 %v647, %v663
    %v680 = vadd.f32 %v648, %v664
    %v681 = vadd.f32 %v649, %v665
    %v682 = vadd.f32 %v650, %v666
    %v683 = vmul.f32 %v667, 0.5
    %v684 = vmul.f32 %v668, 0.5
    %v685 = vmul.f32 %v669, 0.5
    %v686 = vmul.f32 %v670, 0.5
    %v687 = vmul.f32 %v671, 0.5
    %v688 = vmul.f32 %v672, 0.5
    %v689 = vmul.f32 %v673, 0.5
    %v690 = vmul.f32 %v674, 0.5
    %v691 = vmul.f32 %v675, 0.5
    %v692 = vmul.f32 %v676, 0.5
    %v693 = vmul.f32 %v677, 0.5
    %v694 = vmul.f32 %v678, 0.5
    %v695 = vmul.f32 %v679, 0.5
    %v696 = vmul.f32 %v680, 0.5
    %v697 = vmul.f32 %v681, 0.5
    %v698 = vmul.f32 %v682, 0.5
    %v699 = vadd.f32 %v619, %v683
    %v700 = vadd.f32 %v620, %v684
    %v701 = vadd.f32 %v621, %v685
    %v702 = vadd.f32 %v622, %v686
    %v703 = vadd.f32 %v623, %v687
    %v704 = vadd.f32 %v624, %v688
    %v705 = vadd.f32 %v625, %v689
    %v706 = vadd.f32 %v626, %v690
    %v707 = vadd.f32 %v627, %v691
    %v708 = vadd.f32 %v628, %v692
    %v709 = vadd.f32 %v629, %v693
    %v710 = vadd.f32 %v630, %v694
    %v711 = vadd.f32 %v631, %v695
    %v712 = vadd.f32 %v632, %v696
    %v713 = vadd.f32 %v633, %v697
    %v714 = vadd.f32 %v634, %v698
    %v715 = vsub.f32 %v699, 0.5
    %v716 = vsub.f32 %v700, 0.5
    %v717 = vsub.f32 %v701, 0.5
    %v718 = vsub.f32 %v702, 0.5
    %v719 = vsub.f32 %v703, 0.5
    %v720 = vsub.f32 %v704, 0.5
    %v721 = vsub.f32 %v705, 0.5
    %v722 = vsub.f32 %v706, 0.5
    %v723 = vsub.f32 %v707, 0.5
    %v724 = vsub.f32 %v708, 0.5
    %v725 = vsub.f32 %v709, 0.5
    %v726 = vsub.f32 %v710, 0.5
    %v727 = vsub.f32 %v711, 0.5
    %v728 = vsub.f32 %v712, 0.5
    %v729 = vsub.f32 %v713, 0.5
    %v730 = vsub.f32 %v714, 0.5
    %v731 = vadd.f32 %v715, %v716
    %v732 = vadd.f32 %v731, %v717
    %v733 = vadd.f32 %v732, %v718
    %v734 = vadd.f32 %v733, %v719
    %v735 = vadd.f32 %v734, %v720
    %v736 = vadd.f32 %v735, %v721
    %v737 = vadd.f32 %v736, %v722
    %v738 = vadd.f32 %v737, %v723
    %v739 = vadd.f32 %v738, %v724
    %v740 = vadd.f32 %v739, %v725
    %v741 = vadd.f32 %v740, %v726
    %v742 = vadd.f32 %v741, %v727
    %v743 = vadd.f32 %v742, %v728
    %v744 = vadd.f32 %v743, %v729
    %v745 = vadd.f32 %v744, %v730
    %746 = vadd.xlane.f32.xlu0 %v745
    %v747 = vpop.xlane.xlu0 %746
    %v748 = vrot.slane %v747, 4
    %v749 = vadd.f32 %v747, %v748
    %v750 = vrot.slane %v749, 2
    %v751 = vadd.f32 %v749, %v750
    %v752 = vrot.slane %v751, 1
    %v753 = vadd.f32 %v751, %v752
    %s754 = vtos %v753
    %v755 = vstv %s754
    %v756 = vadd.f32 %v586, %v755
    %v757 = vlog2.pop %v404
    %v758 = vmul.f32 %v757, 0.6931472
    %v759 = vsub.f32 0.0, %v758
    %v760 = vmul.f32 %v404, %v404
    %v761 = vmul.f32 %v399, %v399
    %v763 = vrot.slane %v761, 7
    %v765 = vadd.f32 %v760, %v763
    %v766 = vmul.f32 %v765, 0.5
    %v767 = vadd.f32 %v759, %v766
    %v768 = vsub.f32 %v767, 0.5
    %v770 = vrot.slane %v768, 1
    %vm772 = vcmask 1040384
    %v773 = vsel %vm772, %v770, 0.0
    %774 = vadd.xlane.f32.xlu0 %v773
    %v775 = vpop.xlane.xlu0 %774
    %v776 = vrot.slane %v775, 4
    %v777 = vadd.f32 %v775, %v776
    %v778 = vrot.slane %v777, 2
    %v779 = vadd.f32 %v777, %v778
    %v780 = vrot.slane %v779, 1
    %v781 = vadd.f32 %v779, %v780
    %s782 = vtos %v781
    %v783 = vstv %s782
    %v784 = vadd.f32 %v756, %v783
    %v785 = vrot.slane %v768, 4
    %v787 = vsel %vm772, %v785, 0.0
    %788 = vadd.xlane.f32.xlu0 %v787
    %v789 = vpop.xlane.xlu0 %788
    %v790 = vrot.slane %v789, 4
    %v791 = vadd.f32 %v789, %v790
    %v792 = vrot.slane %v791, 2
    %v793 = vadd.f32 %v791, %v792
    %v794 = vrot.slane %v793, 1
    %v795 = vadd.f32 %v793, %v794
    %s796 = vtos %v795
    %v797 = vstv %s796
    %v798 = vadd.f32 %v784, %v797
    %vm799 = vcmask 0
    %800 = vst.msk [vmem:[#allocation10] sm:$0x1] %vm799, %v798
    // Predicated region
    $region18: #{tpu_custom_call.1} parent=1 // pred_check
      _
    $region19: #{tpu_custom_call.1} parent=1 // pred_check_branch
      %802 = sbr.rel (0) target = $region21
    $region20: #{tpu_custom_call.1} parent=1 // pred_region
      %s804 = ssub.s32 2048, 2048
      %805 = vsyncadd [#allocation4], %s804
      %s806 = sshll.u32 [#allocation7], 4
      %s807 = int_to_ptr.vmem [resolvable:$true] %s806
      %812 = dma.vmem_to_hbm [thread:$0]  %s807, 2048, %s2, [#allocation4], 128, 128, 8
    $region21: #{tpu_custom_call.1} parent=1 // pred_fallthru
      _
    // Predicated region
    $region22: #{tpu_custom_call.1} parent=1 // pred_check
      _
    $region23: #{tpu_custom_call.1} parent=1 // pred_check_branch
      %814 = sbr.rel (0) target = $region25
    $region24: #{tpu_custom_call.1} parent=1 // pred_region
      %s816 = ssub.s32 16, 16
      %817 = vsyncadd [#allocation9], %s816
      %s819 = sshll.u32 [#allocation8], 4
      %s820 = int_to_ptr.vmem [resolvable:$true] %s819
      %822 = dma.vmem_to_hbm [thread:$0]  %s820, 16, %s3, [#allocation9]
    $region25: #{tpu_custom_call.1} parent=1 // pred_fallthru
      _
    // Predicated region
    $region26: #{tpu_custom_call.1} parent=1 // pred_check
      _
    $region27: #{tpu_custom_call.1} parent=1 // pred_check_branch
      %824 = sbr.rel (0) target = $region29
    $region28: #{tpu_custom_call.1} parent=1 // pred_region
      %s826 = ssub.s32 16, 16
      %827 = vsyncadd [#allocation9], %s826
      %s829 = sshll.u32 [#allocation10], 4
      %s830 = int_to_ptr.vmem [resolvable:$true] %s829
      %832 = dma.vmem_to_hbm [thread:$0]  %s830, 16, %s4, [#allocation9]
    $region29: #{tpu_custom_call.1} parent=1 // pred_fallthru
      _
    // Predicated region
    $region30: #{tpu_custom_call.1} parent=1 // pred_check
      _
    $region31: #{tpu_custom_call.1} parent=1 // pred_check_branch
      %834 = sbr.rel (0) target = $region33
    $region32: #{tpu_custom_call.1} parent=1 // pred_region
      %835 = dma.done [#allocation4], 2048
    $region33: #{tpu_custom_call.1} parent=1 // pred_fallthru
      _
    // Predicated region
    $region34: #{tpu_custom_call.1} parent=1 // pred_check
      _
    $region35: #{tpu_custom_call.1} parent=1 // pred_check_branch
      %837 = sbr.rel (0) target = $region37
    $region36: #{tpu_custom_call.1} parent=1 // pred_region
      %838 = dma.done [#allocation9], 16
    $region37: #{tpu_custom_call.1} parent=1 // pred_fallthru
      _
    // Predicated region
    $region38: #{tpu_custom_call.1} parent=1 // pred_check
      _
    $region39: #{tpu_custom_call.1} parent=1 // pred_check_branch
      %840 = sbr.rel (0) target = $region41
    $region40: #{tpu_custom_call.1} parent=1 // pred_region
      %841 = dma.done [#allocation9], 16
    $region41: #{tpu_custom_call.1} parent=1 // pred_fallthru
      _
    %842 = vsyncpa [#allocation3], 1
    %843 = vsyncpa [#allocation6], 1
    %844 = vsyncpa [#allocation4], 1
    %845 = vsyncpa [#allocation9], 1

</llo_original>
